<compile_context>
chip_gen: v7x
topology: tpu7x:2x2x1
jax: 0.10.0
libtpu: 0.0.40
codegen_flags: <defaults>
</compile_context>

<pallas_src>
import numpy as np
import jax
import jax.numpy as jnp
from jax.experimental import pallas as pl
from jax.experimental.pallas import tpu as pltpu


def _round_up(x, m):
    return ((x + m - 1) // m) * m


# ----------------------------------------------------------------------------
# Kernel 1: im2col matmul + bias + ReLU  (one conv layer)
#   A:(tm, K) bf16  x  W:(K, c_out) bf16  -> f32 acc, + bias, ReLU, bf16 store.
#   Only the real c_out channels are written back to HBM.
# ----------------------------------------------------------------------------
def _conv_relu_kernel(a_ref, w_ref, b_ref, o_ref):
    acc = jnp.dot(a_ref[...], w_ref[...], preferred_element_type=jnp.float32)
    acc = acc + b_ref[...]                       # bias broadcast (1, c_out), f32
    o_ref[...] = jnp.maximum(acc, 0.0).astype(o_ref.dtype)


def _im2col_nhwc(x, k, stride, padding):
    """x: (N, H, W, C) -> A: (N*Ho*Wo, k*k*C) with K order (kh, kw, C)."""
    N, H, W, C = x.shape
    Ho = (H + 2 * padding - k) // stride + 1
    Wo = (W + 2 * padding - k) // stride + 1
    xp = jnp.pad(x, ((0, 0), (padding, padding), (padding, padding), (0, 0)))
    patches = []
    for i in range(k):
        for j in range(k):
            patches.append(
                xp[:, i:i + stride * Ho:stride, j:j + stride * Wo:stride, :])
    A = jnp.stack(patches, axis=3)               # (N, Ho, Wo, k*k, C)
    A = A.reshape(N * Ho * Wo, k * k * C)        # (M, K), stays bf16
    return A, Ho, Wo


def conv2d_relu_nhwc(x, wm_bf16, bm_f32, k, stride, padding, c_out,
                     tm_target=1024):
    """x: (N, H, W, C_in) bf16; wm_bf16: (K, c_out) bf16; bm_f32: (1, c_out)."""
    N = x.shape[0]
    A, Ho, Wo = _im2col_nhwc(x, k, stride, padding)
    M, K = A.shape

    # Adaptive M tile: multiple of 8, big enough to amortize per-step overhead,
    # but capped so there are >= 2 grid steps (v7x megacore sharding).
    tm = max(8, min(tm_target, _round_up(pl.cdiv(M, 2), 8)))
    grid = (pl.cdiv(M, tm),)                     # ragged last block is masked

    out = pl.pallas_call(
        _conv_relu_kernel,
        out_shape=jax.ShapeDtypeStruct((M, c_out), jnp.bfloat16),
        grid=grid,
        in_specs=[
            pl.BlockSpec((tm, K), lambda i: (i, 0)),
            pl.BlockSpec((K, c_out), lambda i: (0, 0)),
            pl.BlockSpec((1, c_out), lambda i: (0, 0)),
        ],
        out_specs=pl.BlockSpec((tm, c_out), lambda i: (i, 0)),
        compiler_params=pltpu.CompilerParams(dimension_semantics=("parallel",)),
    )(A, wm_bf16, bm_f32)

    return out.reshape(N, Ho, Wo, c_out)         # stay channels-last, bf16


# ----------------------------------------------------------------------------
# Kernel 2: SpatialSoftmax on NHWC features (no pre-head relayout).
#   One image per grid step: softmax over the H*W (sublane) axis per channel
#   lane, expected x/y keypoints with (HW, 1) position weights.
# ----------------------------------------------------------------------------
def _spatial_softmax_kernel(f_ref, px_ref, py_ref, o_ref):
    f = f_ref[0].astype(jnp.float32)             # (HW, C)
    m = jnp.max(f, axis=0, keepdims=True)        # (1, C)
    e = jnp.exp(f - m)
    s = jnp.sum(e, axis=0, keepdims=True)        # (1, C)
    inv_s = pl.reciprocal(s, approx=False)       # exact normalization
    ex = jnp.sum(e * px_ref[...], axis=0, keepdims=True) * inv_s
    ey = jnp.sum(e * py_ref[...], axis=0, keepdims=True) * inv_s
    o_ref[0] = jnp.concatenate([ex, ey], axis=0)  # (2, C)


def spatial_softmax_nhwc(x_nhwc, px, py):
    """x: (N, H, W, C) -> (N, 2*C), interleaved [x_c0, y_c0, x_c1, y_c1, ...]."""
    N, H, W, C = x_nhwc.shape
    HW = H * W
    f = x_nhwc.reshape(N, HW, C)                 # contiguous view, no relayout

    out = pl.pallas_call(
        _spatial_softmax_kernel,
        out_shape=jax.ShapeDtypeStruct((N, 2, C), jnp.float32),
        grid=(N,),
        in_specs=[
            pl.BlockSpec((1, HW, C), lambda n: (n, 0, 0)),
            pl.BlockSpec((HW, 1), lambda n: (0, 0)),
            pl.BlockSpec((HW, 1), lambda n: (0, 0)),
        ],
        out_specs=pl.BlockSpec((1, 2, C), lambda n: (n, 0, 0)),
        compiler_params=pltpu.CompilerParams(dimension_semantics=("parallel",)),
    )(f, px, py)
    # (N, 2, C) -> (N, C, 2) -> (N, 2C): [x_c0, y_c0, x_c1, y_c1, ...]
    return out.transpose(0, 2, 1).reshape(N, 2 * C)


# ----------------------------------------------------------------------------
# Encoder (ConvNet) wrapper with deterministic in-script parameter init
# ----------------------------------------------------------------------------
class EncoderPallas:
    """Pallas re-implementation of sac.Encoder: shared conv trunk of SAC."""

    def __init__(self, input_n_channel, img_sz, kernel_sz, stride, padding,
                 n_channel, use_sm=True, seed=0):
        self.kernel_sz = list(kernel_sz)
        self.stride = list(stride)
        self.padding = list(padding)
        self.use_sm = use_sm

        key = jax.random.PRNGKey(seed)
        self.layers = []              # (Wm_bf16 (K,Co), bm_f32 (1,Co), k, s, p, Co)
        in_c = input_n_channel
        h = w = img_sz
        for k, s, p, out_c in zip(self.kernel_sz, self.stride, self.padding,
                                  n_channel):
            key, wk, bk = jax.random.split(key, 3)
            fan_in = in_c * k * k
            bound = 1.0 / np.sqrt(fan_in)        # PyTorch Conv2d default init
            wgt = jax.random.uniform(wk, (out_c, in_c, k, k), jnp.float32,
                                     -bound, bound)
            bias = jax.random.uniform(bk, (out_c,), jnp.float32, -bound, bound)

            # Pre-flatten to matmul form with K order (kh, kw, C_in) to match
            # the NHWC im2col.  No channel padding: only real channels are
            # stored back to HBM by the kernel.
            K = in_c * k * k
            wm = wgt.transpose(2, 3, 1, 0).reshape(K, out_c).astype(jnp.bfloat16)
            bm = bias.reshape(1, out_c).astype(jnp.float32)
            self.layers.append((wm, bm, k, s, p, out_c))

            in_c = out_c
            h = (h + 2 * p - k) // s + 1
            w = (w + 2 * p - k) // s + 1
        self.out_c, self.out_h, self.out_w = in_c, h, w

        # SpatialSoftmax position grids, matching the usual PyTorch reference
        # construction (only well-defined for square feature maps H == W).
        pos_x, pos_y = np.meshgrid(np.linspace(-1.0, 1.0, self.out_h),
                                   np.linspace(-1.0, 1.0, self.out_w))
        HW = self.out_h * self.out_w
        self.px = jnp.asarray(pos_x.reshape(HW, 1), jnp.float32)
        self.py = jnp.asarray(pos_y.reshape(HW, 1), jnp.float32)

        # Single jitted trunk: all glue (im2col, casts, reshapes) fuses here.
        self._forward = jax.jit(self._trunk)

    def get_output_dim(self):
        if self.use_sm:
            return self.out_c * 2
        return self.out_c * self.out_h * self.out_w

    def _trunk(self, image_nchw):
        # NCHW -> NHWC once at the boundary; bf16 activations through the trunk.
        x = jnp.transpose(image_nchw.astype(jnp.bfloat16), (0, 2, 3, 1))
        for (wm, bm, k, s, p, co) in self.layers:
            x = conv2d_relu_nhwc(x, wm, bm, k, s, p, co)
        if self.use_sm:
            return spatial_softmax_nhwc(x, self.px, self.py)
        # Flatten in NCHW order to match the PyTorch module's output layout.
        x_nchw = jnp.transpose(x, (0, 3, 1, 2)).astype(jnp.float32)
        return x_nchw.reshape(x_nchw.shape[0], -1)

    def __call__(self, image, detach=False):
        if image.ndim == 3:                      # matches Encoder.forward unsqueeze(0)
            image = image[None]
        out = self._forward(image)
        if detach:
            out = jax.lax.stop_gradient(out)
        return out


if __name__ == "__main__":
    key = jax.random.PRNGKey(0)
    N, Cin, S = 2, 4, 16
    img = jax.random.uniform(key, (N, Cin, S, S), dtype=jnp.float32)

    enc = EncoderPallas(
        input_n_channel=Cin, img_sz=S,
        kernel_sz=[3, 3], stride=[2, 1], padding=[1, 1],
        n_channel=[8, 16], use_sm=True, seed=0,
    )

    out = enc(img)
    out = jax.block_until_ready(out)
    assert out.shape == (N, enc.get_output_dim()), out.shape
    assert bool(jnp.all(jnp.isfinite(out)))
    print("KERNEL_OK")
</pallas_src>

<mosaic_0001>
module attributes {stable_mosaic.version = 11 : i64} {
  func.func @_conv_relu_kernel(%arg0: i32, %arg1: memref<64x36xbf16, #tpu.memory_space<vmem>>, %arg2: memref<36x8xbf16, #tpu.memory_space<vmem>>, %arg3: memref<1x8xf32, #tpu.memory_space<vmem>>, %arg4: memref<64x8xbf16, #tpu.memory_space<vmem>>) attributes {dimension_semantics = [#tpu.dimension_semantics<parallel>], iteration_bounds = array<i64: 2>, scalar_prefetch = 0 : i64, scratch_operands = 0 : i64, tpu.core_type = #tpu.core_type<tc>, window_params = [{transform_indices = @transform_0, window_bounds = array<i64: 64, 36>}, {pipeline_mode = #tpu.pipeline_mode<synchronous>, transform_indices = @transform_1, window_bounds = array<i64: 36, 8>}, {pipeline_mode = #tpu.pipeline_mode<synchronous>, transform_indices = @transform_2, window_bounds = array<i64: 1, 8>}, {transform_indices = @transform_3, window_bounds = array<i64: 64, 8>}]} {
    %c0 = arith.constant 0 : index
    %c0_0 = arith.constant 0 : index
    %0 = vector.load %arg1[%c0, %c0_0] : memref<64x36xbf16, #tpu.memory_space<vmem>>, vector<64x36xbf16>
    %c0_1 = arith.constant 0 : index
    %c0_2 = arith.constant 0 : index
    %1 = vector.load %arg2[%c0_1, %c0_2] : memref<36x8xbf16, #tpu.memory_space<vmem>>, vector<36x8xbf16>
    %cst = arith.constant dense<0.000000e+00> : vector<64x8xf32>
    %2 = tpu.matmul %0, %1, %cst {dimension_numbers = #tpu.dot_dimension_numbers<[1], [0], [0], [1], [0, 0, 1, 1], [], []>} : vector<64x36xbf16>, vector<36x8xbf16>, vector<64x8xf32> -> vector<64x8xf32>
    %c0_3 = arith.constant 0 : index
    %c0_4 = arith.constant 0 : index
    %3 = vector.load %arg3[%c0_3, %c0_4] : memref<1x8xf32, #tpu.memory_space<vmem>>, vector<1x8xf32>
    %4 = vector.broadcast %3 : vector<1x8xf32> to vector<64x8xf32>
    %5 = arith.addf %2, %4 : vector<64x8xf32>
    %cst_5 = arith.constant 0.000000e+00 : f32
    %6 = vector.broadcast %cst_5 : f32 to vector<64x8xf32>
    %7 = arith.maximumf %5, %6 : vector<64x8xf32>
    %8 = arith.truncf %7 : vector<64x8xf32> to vector<64x8xbf16>
    %c0_6 = arith.constant 0 : index
    %c0_7 = arith.constant 0 : index
    %9 = vector.load %arg4[%c0_6, %c0_7] : memref<64x8xbf16, #tpu.memory_space<vmem>>, vector<64x8xbf16>
    tpu.vector_store %arg4[%c0_6, %c0_7], %8 {strides = array<i32>} : memref<64x8xbf16, #tpu.memory_space<vmem>>, vector<64x8xbf16>,
    return
  }
  func.func @transform_0(%arg0: i32) -> (i32, i32) {
    %c0_i32 = arith.constant 0 : i32
    %c0_i32_0 = arith.constant 0 : i32
    return %arg0, %c0_i32 : i32, i32
  }
  func.func @transform_1(%arg0: i32) -> (i32, i32) {
    %c0_i32 = arith.constant 0 : i32
    %c0_i32_0 = arith.constant 0 : i32
    %c0_i32_1 = arith.constant 0 : i32
    return %c0_i32, %c0_i32_0 : i32, i32
  }
  func.func @transform_2(%arg0: i32) -> (i32, i32) {
    %c0_i32 = arith.constant 0 : i32
    %c0_i32_0 = arith.constant 0 : i32
    %c0_i32_1 = arith.constant 0 : i32
    return %c0_i32, %c0_i32_0 : i32, i32
  }
  func.func @transform_3(%arg0: i32) -> (i32, i32) {
    %c0_i32 = arith.constant 0 : i32
    %c0_i32_0 = arith.constant 0 : i32
    return %arg0, %c0_i32 : i32, i32
  }
}

module attributes {stable_mosaic.version = 11 : i64} {
  func.func @_conv_relu_kernel(%arg0: i32, %arg1: memref<64x72xbf16, #tpu.memory_space<vmem>>, %arg2: memref<72x16xbf16, #tpu.memory_space<vmem>>, %arg3: memref<1x16xf32, #tpu.memory_space<vmem>>, %arg4: memref<64x16xbf16, #tpu.memory_space<vmem>>) attributes {dimension_semantics = [#tpu.dimension_semantics<parallel>], iteration_bounds = array<i64: 2>, scalar_prefetch = 0 : i64, scratch_operands = 0 : i64, tpu.core_type = #tpu.core_type<tc>, window_params = [{transform_indices = @transform_0, window_bounds = array<i64: 64, 72>}, {pipeline_mode = #tpu.pipeline_mode<synchronous>, transform_indices = @transform_1, window_bounds = array<i64: 72, 16>}, {pipeline_mode = #tpu.pipeline_mode<synchronous>, transform_indices = @transform_2, window_bounds = array<i64: 1, 16>}, {transform_indices = @transform_3, window_bounds = array<i64: 64, 16>}]} {
    %c0 = arith.constant 0 : index
    %c0_0 = arith.constant 0 : index
    %0 = vector.load %arg1[%c0, %c0_0] : memref<64x72xbf16, #tpu.memory_space<vmem>>, vector<64x72xbf16>
    %c0_1 = arith.constant 0 : index
    %c0_2 = arith.constant 0 : index
    %1 = vector.load %arg2[%c0_1, %c0_2] : memref<72x16xbf16, #tpu.memory_space<vmem>>, vector<72x16xbf16>
    %cst = arith.constant dense<0.000000e+00> : vector<64x16xf32>
    %2 = tpu.matmul %0, %1, %cst {dimension_numbers = #tpu.dot_dimension_numbers<[1], [0], [0], [1], [0, 0, 1, 1], [], []>} : vector<64x72xbf16>, vector<72x16xbf16>, vector<64x16xf32> -> vector<64x16xf32>
    %c0_3 = arith.constant 0 : index
    %c0_4 = arith.constant 0 : index
    %3 = vector.load %arg3[%c0_3, %c0_4] : memref<1x16xf32, #tpu.memory_space<vmem>>, vector<1x16xf32>
    %4 = vector.broadcast %3 : vector<1x16xf32> to vector<64x16xf32>
    %5 = arith.addf %2, %4 : vector<64x16xf32>
    %cst_5 = arith.constant 0.000000e+00 : f32
    %6 = vector.broadcast %cst_5 : f32 to vector<64x16xf32>
    %7 = arith.maximumf %5, %6 : vector<64x16xf32>
    %8 = arith.truncf %7 : vector<64x16xf32> to vector<64x16xbf16>
    %c0_6 = arith.constant 0 : index
    %c0_7 = arith.constant 0 : index
    %9 = vector.load %arg4[%c0_6, %c0_7] : memref<64x16xbf16, #tpu.memory_space<vmem>>, vector<64x16xbf16>
    tpu.vector_store %arg4[%c0_6, %c0_7], %8 {strides = array<i32>} : memref<64x16xbf16, #tpu.memory_space<vmem>>, vector<64x16xbf16>,
    return
  }
  func.func @transform_0(%arg0: i32) -> (i32, i32) {
    %c0_i32 = arith.constant 0 : i32
    %c0_i32_0 = arith.constant 0 : i32
    return %arg0, %c0_i32 : i32, i32
  }
  func.func @transform_1(%arg0: i32) -> (i32, i32) {
    %c0_i32 = arith.constant 0 : i32
    %c0_i32_0 = arith.constant 0 : i32
    %c0_i32_1 = arith.constant 0 : i32
    return %c0_i32, %c0_i32_0 : i32, i32
  }
  func.func @transform_2(%arg0: i32) -> (i32, i32) {
    %c0_i32 = arith.constant 0 : i32
    %c0_i32_0 = arith.constant 0 : i32
    %c0_i32_1 = arith.constant 0 : i32
    return %c0_i32, %c0_i32_0 : i32, i32
  }
  func.func @transform_3(%arg0: i32) -> (i32, i32) {
    %c0_i32 = arith.constant 0 : i32
    %c0_i32_0 = arith.constant 0 : i32
    return %arg0, %c0_i32 : i32, i32
  }
}

module attributes {stable_mosaic.version = 11 : i64} {
  func.func @_spatial_softmax_kernel(%arg0: i32, %arg1: memref<1x64x16xbf16, #tpu.memory_space<vmem>>, %arg2: memref<64x1xf32, #tpu.memory_space<vmem>>, %arg3: memref<64x1xf32, #tpu.memory_space<vmem>>, %arg4: memref<1x2x16xf32, #tpu.memory_space<vmem>>) attributes {dimension_semantics = [#tpu.dimension_semantics<parallel>], iteration_bounds = array<i64: 2>, scalar_prefetch = 0 : i64, scratch_operands = 0 : i64, tpu.core_type = #tpu.core_type<tc>, window_params = [{transform_indices = @transform_0, window_bounds = array<i64: 1, 64, 16>}, {pipeline_mode = #tpu.pipeline_mode<synchronous>, transform_indices = @transform_1, window_bounds = array<i64: 64, 1>}, {pipeline_mode = #tpu.pipeline_mode<synchronous>, transform_indices = @transform_2, window_bounds = array<i64: 64, 1>}, {transform_indices = @transform_3, window_bounds = array<i64: 1, 2, 16>}]} {
    %c0 = arith.constant 0 : index
    %c0_0 = arith.constant 0 : index
    %c0_1 = arith.constant 0 : index
    %0 = vector.load %arg1[%c0, %c0_0, %c0_1] : memref<1x64x16xbf16, #tpu.memory_space<vmem>>, vector<1x64x16xbf16>
    %1 = vector.shape_cast %0 : vector<1x64x16xbf16> to vector<64x16xbf16>
    %2 = arith.extf %1 : vector<64x16xbf16> to vector<64x16xf32>
    %cst = arith.constant dense<0xFF800000> : vector<16xf32>
    %3 = vector.multi_reduction <maximumf>, %2, %cst [0] : vector<64x16xf32> to vector<16xf32>
    %4 = vector.shape_cast %3 : vector<16xf32> to vector<1x16xf32>
    %5 = vector.broadcast %4 : vector<1x16xf32> to vector<64x16xf32>
    %6 = arith.subf %2, %5 : vector<64x16xf32>
    %7 = math.exp %6 : vector<64x16xf32>
    %cst_2 = arith.constant dense<0.000000e+00> : vector<16xf32>
    %8 = vector.multi_reduction <add>, %7, %cst_2 [0] : vector<64x16xf32> to vector<16xf32>
    %9 = vector.shape_cast %8 : vector<16xf32> to vector<1x16xf32>
    %10 = tpu.reciprocal %9 : vector<1x16xf32> -> vector<1x16xf32>
    %c0_3 = arith.constant 0 : index
    %c0_4 = arith.constant 0 : index
    %11 = vector.load %arg2[%c0_3, %c0_4] : memref<64x1xf32, #tpu.memory_space<vmem>>, vector<64x1xf32>
    %12 = vector.broadcast %11 : vector<64x1xf32> to vector<64x16xf32>
    %13 = arith.mulf %7, %12 : vector<64x16xf32>
    %cst_5 = arith.constant dense<0.000000e+00> : vector<16xf32>
    %14 = vector.multi_reduction <add>, %13, %cst_5 [0] : vector<64x16xf32> to vector<16xf32>
    %15 = vector.shape_cast %14 : vector<16xf32> to vector<1x16xf32>
    %16 = arith.mulf %15, %10 : vector<1x16xf32>
    %c0_6 = arith.constant 0 : index
    %c0_7 = arith.constant 0 : index
    %17 = vector.load %arg3[%c0_6, %c0_7] : memref<64x1xf32, #tpu.memory_space<vmem>>, vector<64x1xf32>
    %18 = vector.broadcast %17 : vector<64x1xf32> to vector<64x16xf32>
    %19 = arith.mulf %7, %18 : vector<64x16xf32>
    %cst_8 = arith.constant dense<0.000000e+00> : vector<16xf32>
    %20 = vector.multi_reduction <add>, %19, %cst_8 [0] : vector<64x16xf32> to vector<16xf32>
    %21 = vector.shape_cast %20 : vector<16xf32> to vector<1x16xf32>
    %22 = arith.mulf %21, %10 : vector<1x16xf32>
    %23 = tpu.concatenate %16, %22 in 0 : vector<1x16xf32>, vector<1x16xf32> -> vector<2x16xf32>
    %c0_9 = arith.constant 0 : index
    %c0_10 = arith.constant 0 : index
    %c0_11 = arith.constant 0 : index
    %24 = vector.load %arg4[%c0_9, %c0_10, %c0_11] : memref<1x2x16xf32, #tpu.memory_space<vmem>>, vector<1x2x16xf32>
    %25 = vector.shape_cast %24 : vector<1x2x16xf32> to vector<2x16xf32>
    %26 = vector.shape_cast %23 : vector<2x16xf32> to vector<1x2x16xf32>
    tpu.vector_store %arg4[%c0_9, %c0_10, %c0_11], %26 {strides = array<i32>} : memref<1x2x16xf32, #tpu.memory_space<vmem>>, vector<1x2x16xf32>,
    return
  }
  func.func @transform_0(%arg0: i32) -> (i32, i32, i32) {
    %c0_i32 = arith.constant 0 : i32
    %c0_i32_0 = arith.constant 0 : i32
    %c0_i32_1 = arith.constant 0 : i32
    return %arg0, %c0_i32, %c0_i32_0 : i32, i32, i32
  }
  func.func @transform_1(%arg0: i32) -> (i32, i32) {
    %c0_i32 = arith.constant 0 : i32
    %c0_i32_0 = arith.constant 0 : i32
    %c0_i32_1 = arith.constant 0 : i32
    return %c0_i32, %c0_i32_0 : i32, i32
  }
  func.func @transform_2(%arg0: i32) -> (i32, i32) {
    %c0_i32 = arith.constant 0 : i32
    %c0_i32_0 = arith.constant 0 : i32
    %c0_i32_1 = arith.constant 0 : i32
    return %c0_i32, %c0_i32_0 : i32, i32
  }
  func.func @transform_3(%arg0: i32) -> (i32, i32, i32) {
    %c0_i32 = arith.constant 0 : i32
    %c0_i32_0 = arith.constant 0 : i32
    %c0_i32_1 = arith.constant 0 : i32
    return %arg0, %c0_i32, %c0_i32_0 : i32, i32, i32
  }
}

</mosaic_0001>

<llo_original>
// kernel: _trunk.3
$region0: #{_trunk.3}
  #allocation0 [shape = 'u32[]', space=smem, size = 0x4, offset = 0x4, fixed_abs, tag = 'smem constant byte address 0x4 - core index']
  #allocation1 [shape = 'u32[144,128]{1,0:T(1,128)}', space=vmem, size = 0x12000, scoped, tag = 'internal scratch']
  %s0 = inlined_call_operand.vmem [shape: bf16[128,36], index: 0, kind: input, shape index: {}]
  %s1 = inlined_call_operand.vmem [shape: bf16[36,8], index: 1, kind: input, shape index: {}]
  %s2 = inlined_call_operand.vmem [shape: f32[1,8], index: 2, kind: input, shape index: {}]
  %s3 = inlined_call_operand.vmem [shape: bf16[128,8], index: 3, kind: output, shape index: {}]
  %s4 = sld [smem:[#allocation0]]
  $region45: #{_trunk.3} parent=0
    _
  %s6 = ssub.s32 1, %s4
  %s7 = scalar_select 0, %s6, %s4
  loop: start=0, step=1, limit=4
  $region2: #{_trunk.3} parent=0 // loop_pre_header
    _
  $region3: #{_trunk.3} parent=0 // loop_header
    %s9 = sphi 0, %s13
    %p10 = scmp.ge.s32.totalorder %s9, 4
    %s19 = sphi 0, %s21
    %s22 = sphi 0, %s19
    %s23 = sphi 0, %s22
    %s39 = sphi 0, %s23
    %s43 = sphi 0, %s43
    %s45 = sphi 0, %s43
    %s46 = sphi 0, %s45
    %s60 = sphi 0, %s46
    %s64 = sphi 0, %s64
    %s66 = sphi 0, %s64
    %s67 = sphi 0, %s66
    %s81 = sphi 0, %s67
    %s87 = sphi 0, %s89
    %s90 = sphi 0, %s87
    %s91 = sphi 0, %s90
    %s107 = sphi 0, %s91
  $region4: #{_trunk.3} parent=0 // loop_header_branch
    %12 = sbr.rel (%p10) target = $region8
  $region5: #{_trunk.3} parent=0 // loop_body
    %s14 = ssub.s32 %s9, 1
    %s15 = ssub.s32 %s9, 2
    %s16 = sadd.s32 %s9, 1
    %s17 = ssub.s32 %s9, %s16
    %p18 = scmp.eq.s32.totalorder %s17, 0
    %s20 = sadd.s32 %s19, 1
    %s21 = scalar_select %p18, %s19, %s20
    %p24 = pneg %p18
    %p25 = scmp.eq.s32.totalorder %s9, 1
    %p26 = por %p24, %p25
    %p27 = scmp.ne.s32.totalorder %s19, %s22
    %p28 = scmp.eq.s32.totalorder %s9, 0
    %p29 = por %p27, %p28
    %p30 = scmp.ne.s32.totalorder %s19, %s22
    %p31 = scmp.eq.s32.totalorder %s14, 1
    %p32 = por %p30, %p31
    %p33 = scmp.ne.s32.totalorder %s22, %s23
    %p34 = scmp.eq.s32.totalorder %s14, 0
    %p35 = por %p33, %p34
    %p36 = scmp.ne.s32.totalorder %s22, %s23
    %p37 = scmp.eq.s32.totalorder %s15, 1
    %p38 = por %p36, %p37
    %p40 = scmp.ne.s32.totalorder %s23, %s39
    %p41 = scmp.eq.s32.totalorder %s15, 0
    %p42 = por %p40, %p41
    %s44 = sadd.s32 %s43, 1
    %p47 = scmp.eq.s32.totalorder %s9, 1
    %p48 = scmp.ne.s32.totalorder %s43, %s45
    %p49 = scmp.eq.s32.totalorder %s9, 0
    %p50 = por %p48, %p49
    %p51 = scmp.ne.s32.totalorder %s43, %s45
    %p52 = scmp.eq.s32.totalorder %s14, 1
    %p53 = por %p51, %p52
    %p54 = scmp.ne.s32.totalorder %s45, %s46
    %p55 = scmp.eq.s32.totalorder %s14, 0
    %p56 = por %p54, %p55
    %p57 = scmp.ne.s32.totalorder %s45, %s46
    %p58 = scmp.eq.s32.totalorder %s15, 1
    %p59 = por %p57, %p58
    %p61 = scmp.ne.s32.totalorder %s46, %s60
    %p62 = scmp.eq.s32.totalorder %s15, 0
    %p63 = por %p61, %p62
    %s65 = sadd.s32 %s64, 1
    %p68 = scmp.eq.s32.totalorder %s9, 1
    %p69 = scmp.ne.s32.totalorder %s64, %s66
    %p70 = scmp.eq.s32.totalorder %s9, 0
    %p71 = por %p69, %p70
    %p72 = scmp.ne.s32.totalorder %s64, %s66
    %p73 = scmp.eq.s32.totalorder %s14, 1
    %p74 = por %p72, %p73
    %p75 = scmp.ne.s32.totalorder %s66, %s67
    %p76 = scmp.eq.s32.totalorder %s14, 0
    %p77 = por %p75, %p76
    %p78 = scmp.ne.s32.totalorder %s66, %s67
    %p79 = scmp.eq.s32.totalorder %s15, 1
    %p80 = por %p78, %p79
    %p82 = scmp.ne.s32.totalorder %s67, %s81
    %p83 = scmp.eq.s32.totalorder %s15, 0
    %p84 = por %p82, %p83
    %s85 = ssub.s32 %s9, %s16
    %p86 = scmp.eq.s32.totalorder %s85, 0
    %s88 = sadd.s32 %s87, 1
    %s89 = scalar_select %p86, %s87, %s88
    %p92 = pneg %p86
    %p93 = scmp.eq.s32.totalorder %s9, 1
    %p94 = por %p92, %p93
    %p95 = scmp.ne.s32.totalorder %s87, %s90
    %p96 = scmp.eq.s32.totalorder %s9, 0
    %p97 = por %p95, %p96
    %p98 = scmp.ne.s32.totalorder %s87, %s90
    %p99 = scmp.eq.s32.totalorder %s14, 1
    %p100 = por %p98, %p99
    %p101 = scmp.ne.s32.totalorder %s90, %s91
    %p102 = scmp.eq.s32.totalorder %s14, 0
    %p103 = por %p101, %p102
    %p104 = scmp.ne.s32.totalorder %s90, %s91
    %p105 = scmp.eq.s32.totalorder %s15, 1
    %p106 = por %p104, %p105
    %p108 = scmp.ne.s32.totalorder %s91, %s107
    %p109 = scmp.eq.s32.totalorder %s15, 0
    %p110 = por %p108, %p109
    %p111 = scmp.le.s32.totalorder 1, %s9
    %p112 = scmp.lt.s32.totalorder %s9, 3
    %p113 = pnand %p111, %p112
    %p114 = pneg %p113
    // Predicated region
    $region9: #{_trunk.3} parent=5 // pred_check
      _
    $region10: #{_trunk.3} parent=5 // pred_check_branch
      %116 = sbr.rel (%p113) target = $region12
    $region11: #{_trunk.3} parent=5 // pred_region
      %s117 = ssub.s32 %s9, 1
      // Predicated region
      $region13: #{_trunk.3} parent=11 // pred_check
        %p118 = pneg %p56
      $region14: #{_trunk.3} parent=11 // pred_check_branch
        %120 = sbr.rel (%p118) target = $region16
      $region15: #{_trunk.3} parent=11 // pred_region
        _
      $region16: #{_trunk.3} parent=11 // pred_fallthru
        _
      // Predicated region
      $region17: #{_trunk.3} parent=11 // pred_check
        %p121 = pneg %p77
      $region18: #{_trunk.3} parent=11 // pred_check_branch
        %123 = sbr.rel (%p121) target = $region20
      $region19: #{_trunk.3} parent=11 // pred_region
        _
      $region20: #{_trunk.3} parent=11 // pred_fallthru
        _
    $region12: #{_trunk.3} parent=5 // pred_fallthru
      _
    %p124 = scmp.lt.s32.totalorder %s9, 2
    // Predicated region
    $region21: #{_trunk.3} parent=5 // pred_check
      %p125 = pneg %p124
    $region22: #{_trunk.3} parent=5 // pred_check_branch
      %127 = sbr.rel (%p125) target = $region24
    $region23: #{_trunk.3} parent=5 // pred_region
      // Predicated region
      $region25: #{_trunk.3} parent=23 // pred_check
        %p128 = pneg %p29
      $region26: #{_trunk.3} parent=23 // pred_check_branch
        %130 = sbr.rel (%p128) target = $region28
      $region27: #{_trunk.3} parent=23 // pred_region
        %s131 = smul.u32 8, %s9
        %p132 = scmp.lt.s32.totalorder %s131, 15
        %s133 = scalar_select %p132, %s131, 15
        %s134 = smul.addr %s133, 4
        %s135 = scalar_lea.vmem %s0, %s134
        %s136 = smul.u32 8, %s9
      $region28: #{_trunk.3} parent=23 // pred_fallthru
        _
    $region24: #{_trunk.3} parent=5 // pred_fallthru
      _
    %p137 = scmp.le.s32.totalorder 1, %s9
    %p138 = scmp.lt.s32.totalorder %s9, 3
    %p139 = pnand %p137, %p138
    %p140 = pneg %p139
    // Predicated region
    $region29: #{_trunk.3} parent=5 // pred_check
      _
    $region30: #{_trunk.3} parent=5 // pred_check_branch
      %142 = sbr.rel (%p139) target = $region32
    $region31: #{_trunk.3} parent=5 // pred_region
      %s143 = ssub.s32 %s9, 1
      %s144 = smul.u32 8, %s14
      %p145 = scmp.lt.s32.totalorder %s144, 15
      %s146 = scalar_select %p145, %s144, 15
      %s147 = smul.addr %s146, 4
      %s148 = scalar_lea.vmem %s0, %s147
      %p149 = pneg %p35
      %p150 = pneg %p32
      %p151 = pneg %p56
      %p152 = pneg %p53
      %p153 = pneg %p77
      %p154 = pneg %p74
      %p155 = pneg %p103
      %p156 = pneg %p100
      %s157 = smul.u32 8, %s14
      %p158 = scmp.lt.s32.totalorder %s157, 15
      %s159 = scalar_select %p158, %s157, 15
      %s160 = smul.addr %s159, 4
      %s161 = scalar_lea.vmem %s3, %s160
      %s162 = smul.u32 8, %s14
      %p163 = scmp.lt.s32.totalorder %s162, 15
      %s164 = scalar_select %p163, %s162, 15
      %s165 = smul.addr %s164, 4
      %s166 = scalar_lea.vmem %s0, %s165
      %s167 = smul.u32 8, %s14
      %s168 = smul.u32 8, %s14
      %p169 = scmp.lt.s32.totalorder %s168, 15
      %s170 = scalar_select %p169, %s168, 15
      %s171 = smul.addr %s170, 4
      %s172 = scalar_lea.vmem %s3, %s171
      %s173 = smul.u32 8, %s14
      %v175 = vld [vmem:[%s166] sm:$0xf]
      %v176 = vld [vmem:[%s166 + $0x4] sm:$0xf]
      %v177 = vld [vmem:[%s166 + $0x8] sm:$0xf]
      %v178 = vld [vmem:[%s166 + $0xc] sm:$0xf]
      %v179 = vld [vmem:[%s166 + $0x10] sm:$0xf]
      %v180 = vld [vmem:[%s166 + $0x14] sm:$0xf]
      %v181 = vld [vmem:[%s166 + $0x18] sm:$0xf]
      %v182 = vld [vmem:[%s166 + $0x1c] sm:$0xf]
      %v183 = vld [vmem:[%s1] sm:$0xf]
      %v184 = vld [vmem:[%s1 + $0x4] sm:$0xf]
      %v185 = vld [vmem:[%s1 + $0x8] sm:$0xf]
      %v186 = vld [vmem:[%s1 + $0xc] sm:$0xf]
      %v187 = vld [vmem:[%s1 + $0x10] sm:$0x3]
      %v188 = vld [vmem:[%s2] sm:$0x1]
      %v190 = vlaneseq
      %v191 = vshrl.u32 %v190, 7
      %v192 = vsub.s32 0, %v191
      %v193 = vrot.slane %v188, %v192
      %v203 = vunpack.c.l.b16 %v175
      %v204 = vunpack.c.l.b16 %v176
      %v205 = vunpack.c.l.b16 %v177
      %v206 = vunpack.c.l.b16 %v178
      %v207 = vunpack.c.l.b16 %v179
      %v208 = vunpack.c.l.b16 %v180
      %v209 = vunpack.c.l.b16 %v181
      %v210 = vunpack.c.l.b16 %v182
      %v211 = vpack.c.b16 %v204, %v203
      %v212 = vpack.c.b16 %v206, %v205
      %v213 = vpack.c.b16 %v208, %v207
      %v214 = vpack.c.b16 %v210, %v209
      %v220 = vunpack.c.l.b16 %v183
      %v221 = vunpack.c.l.b16 %v184
      %v222 = vunpack.c.l.b16 %v185
      %v223 = vunpack.c.l.b16 %v186
      %v224 = vunpack.c.l.b16 %v187
      %v225 = vpack.c.b16 %v221, %v220
      %v226 = vpack.c.b16 %v223, %v222
      %v227 = vpack.c.b16 %v224, %v224
      %vm230 = vcmask 293888
      %v232 = vsel %vm230, %v211, 0
      %v235 = vsel %vm230, %v212, 0
      %v238 = vsel %vm230, %v213, 0
      %v241 = vsel %vm230, %v214, 0
      %vm243 = vcmask 1041408
      %v245 = vsel %vm243, %v227, 0
      %247 = vmatprep.subr.bf16.mxu0 0
      %248 = vmatpush1.bf16.msra.mxu0 %v225
      %249 = vmatprep.subr.bf16.mxu0 0
      %250 = vmatpush1.bf16.msra.mxu0 %v226
      %251 = vmatprep.subr.bf16.mxu0 0
      %252 = vmatpush1.bf16.msra.mxu0 %v245
      %253 = vmatprep.subr.bf16.mxu0 0
      %254 = vmatpush1.bf16.msra.mxu0 0
      %255 = vmatprep.subr.bf16.mxu0 0
      %256 = vmatpush1.bf16.msra.mxu0 0
      %257 = vmatprep.subr.bf16.mxu0 0
      %258 = vmatpush1.bf16.msra.mxu0 0
      %259 = vmatprep.subr.bf16.mxu0 0
      %260 = vmatpush1.bf16.msra.mxu0 0
      %261 = vmatprep.subr.bf16.mxu0 0
      %262 = vmatpush1.bf16.msra.mxu0 0
      %263 = vmatprep.subr.bf16.mxu0 0
      %264 = vmatpush1.bf16.msra.mxu0 0
      %265 = vmatprep.subr.bf16.mxu0 0
      %266 = vmatpush1.bf16.msra.mxu0 0
      %267 = vmatprep.subr.bf16.mxu0 0
      %268 = vmatpush1.bf16.msra.mxu0 0
      %269 = vmatprep.subr.bf16.mxu0 0
      %270 = vmatpush1.bf16.msra.mxu0 0
      %271 = vmatprep.subr.bf16.mxu0 0
      %272 = vmatpush1.bf16.msra.mxu0 0
      %273 = vmatprep.subr.bf16.mxu0 0
      %274 = vmatpush1.bf16.msra.mxu0 0
      %275 = vmatprep.subr.bf16.mxu0 0
      %276 = vmatpush1.bf16.msra.mxu0 0
      %277 = vmatprep.subr.bf16.mxu0 0
      %278 = vmatpush1.bf16.msra.mxu0 0
      %279 = vmatprep.mubr.bf16.mxu0 0
      %280 = vmatmul.mubr.bf16.gmra.mrb[0].mxu0 %v232
      %v281 = vpop.f32.mrb[0].mxu0
      %v282 = vadd.f32 %v193, %v281
      %v283 = vpop.f32.mrb[0].mxu0
      %v284 = vpop.f32.mrb[0].mxu0
      %v285 = vadd.f32 %v193, %v284
      %v286 = vpop.f32.mrb[0].mxu0
      %287 = vmatprep.mubr.bf16.mxu0 0
      %288 = vmatmul.mubr.bf16.gmra.mrb[0].mxu0 %v235
      %v289 = vpop.f32.mrb[0].mxu0
      %v290 = vadd.f32 %v193, %v289
      %v291 = vpop.f32.mrb[0].mxu0
      %v292 = vpop.f32.mrb[0].mxu0
      %v293 = vadd.f32 %v193, %v292
      %v294 = vpop.f32.mrb[0].mxu0
      %295 = vmatprep.mubr.bf16.mxu0 0
      %296 = vmatmul.mubr.bf16.gmra.mrb[0].mxu0 %v238
      %v297 = vpop.f32.mrb[0].mxu0
      %v298 = vadd.f32 %v193, %v297
      %v299 = vpop.f32.mrb[0].mxu0
      %v300 = vpop.f32.mrb[0].mxu0
      %v301 = vadd.f32 %v193, %v300
      %v302 = vpop.f32.mrb[0].mxu0
      %303 = vmatprep.mubr.bf16.mxu0 0
      %304 = vmatmul.mubr.bf16.gmra.mrb[0].mxu0 %v241
      %v305 = vpop.f32.mrb[0].mxu0
      %v306 = vadd.f32 %v193, %v305
      %v307 = vpop.f32.mrb[0].mxu0
      %v308 = vpop.f32.mrb[0].mxu0
      %v309 = vadd.f32 %v193, %v308
      %v310 = vpop.f32.mrb[0].mxu0
      %311 = vdwg.mxu0
      %v312 = vmax.f32 %v282, 0.0
      %v313 = vmax.f32 %v285, 0.0
      %v314 = vmax.f32 %v290, 0.0
      %v315 = vmax.f32 %v293, 0.0
      %v316 = vmax.f32 %v298, 0.0
      %v317 = vmax.f32 %v301, 0.0
      %v318 = vmax.f32 %v306, 0.0
      %v319 = vmax.f32 %v309, 0.0
      %v320 = vpack.c.bf16 %v313, %v312
      %v321 = vpack.c.bf16 %v315, %v314
      %v322 = vpack.c.bf16 %v317, %v316
      %v323 = vpack.c.bf16 %v319, %v318
      %v328 = vunpack.c.l.b16 %v320
      %v329 = vunpack.c.h.b16 %v320
      %v330 = vunpack.c.l.b16 %v321
      %v331 = vunpack.c.h.b16 %v321
      %v332 = vunpack.c.l.b16 %v322
      %v333 = vunpack.c.h.b16 %v322
      %v334 = vunpack.c.l.b16 %v323
      %v335 = vunpack.c.h.b16 %v323
      %v336 = vpack.c.b16 %v328, %v328
      %v337 = vpack.c.b16 %v329, %v329
      %v338 = vpack.c.b16 %v330, %v330
      %v339 = vpack.c.b16 %v331, %v331
      %v340 = vpack.c.b16 %v332, %v332
      %v341 = vpack.c.b16 %v333, %v333
      %v342 = vpack.c.b16 %v334, %v334
      %v343 = vpack.c.b16 %v335, %v335
      %vm352 = vcmask 60416
      %353 = vst.msk [vmem:[%s172] sm:$0xf] %vm352, %v336
      %354 = vst.msk [vmem:[%s172 + $0x4] sm:$0xf] %vm352, %v337
      %355 = vst.msk [vmem:[%s172 + $0x8] sm:$0xf] %vm352, %v338
      %356 = vst.msk [vmem:[%s172 + $0xc] sm:$0xf] %vm352, %v339
      %357 = vst.msk [vmem:[%s172 + $0x10] sm:$0xf] %vm352, %v340
      %358 = vst.msk [vmem:[%s172 + $0x14] sm:$0xf] %vm352, %v341
      %359 = vst.msk [vmem:[%s172 + $0x18] sm:$0xf] %vm352, %v342
      %360 = vst.msk [vmem:[%s172 + $0x1c] sm:$0xf] %vm352, %v343
      %s361 = smul.u32 8, %s14
      %p362 = scmp.lt.s32.totalorder %s361, 15
      %s363 = scalar_select %p362, %s361, 15
      %s364 = smul.addr %s363, 4
      %s365 = scalar_lea.vmem %s3, %s364
      // Predicated region
      $region33: #{_trunk.3} parent=31 // pred_check
        %p366 = pneg %p100
      $region34: #{_trunk.3} parent=31 // pred_check_branch
        %368 = sbr.rel (%p366) target = $region36
      $region35: #{_trunk.3} parent=31 // pred_region
        %s369 = smul.u32 8, %s14
      $region36: #{_trunk.3} parent=31 // pred_fallthru
        _
    $region32: #{_trunk.3} parent=5 // pred_fallthru
      _
    %p370 = scmp.le.s32.totalorder 2, %s9
    // Predicated region
    $region37: #{_trunk.3} parent=5 // pred_check
      %p371 = pneg %p370
    $region38: #{_trunk.3} parent=5 // pred_check_branch
      %373 = sbr.rel (%p371) target = $region40
    $region39: #{_trunk.3} parent=5 // pred_region
      %s374 = ssub.s32 %s9, 2
      // Predicated region
      $region41: #{_trunk.3} parent=39 // pred_check
        %p375 = pneg %p106
      $region42: #{_trunk.3} parent=39 // pred_check_branch
        %377 = sbr.rel (%p375) target = $region44
      $region43: #{_trunk.3} parent=39 // pred_region
        %s378 = smul.u32 8, %s15
        %p379 = scmp.lt.s32.totalorder %s378, 15
        %s380 = scalar_select %p379, %s378, 15
        %s381 = smul.addr %s380, 4
        %s382 = scalar_lea.vmem %s3, %s381
      $region44: #{_trunk.3} parent=39 // pred_fallthru
        _
    $region40: #{_trunk.3} parent=5 // pred_fallthru
      _
  $region6: #{_trunk.3} parent=0 // loop_footer
    %s13 = sadd.s32 1, %s9
  $region7: #{_trunk.3} parent=0 // loop_footer_branch
    %8 = sbr.rel target = $region3
  $region8: #{_trunk.3} parent=0 // loop_exit
    _

// kernel: _trunk.4
$region0: #{_trunk.4}
  #allocation0 [shape = 'u32[]', space=smem, size = 0x4, offset = 0x4, fixed_abs, tag = 'smem constant byte address 0x4 - core index']
  #allocation1 [shape = 'u32[144,128]{1,0:T(1,128)}', space=vmem, size = 0x12000, scoped, tag = 'internal scratch']
  %s0 = inlined_call_operand.vmem [shape: bf16[128,72], index: 0, kind: input, shape index: {}]
  %s1 = inlined_call_operand.vmem [shape: bf16[72,16], index: 1, kind: input, shape index: {}]
  %s2 = inlined_call_operand.vmem [shape: f32[1,16], index: 2, kind: input, shape index: {}]
  %s3 = inlined_call_operand.vmem [shape: bf16[128,16], index: 3, kind: output, shape index: {}]
  %s4 = sld [smem:[#allocation0]]
  $region45: #{_trunk.4} parent=0
    _
  %s6 = ssub.s32 1, %s4
  %s7 = scalar_select 0, %s6, %s4
  loop: start=0, step=1, limit=4
  $region2: #{_trunk.4} parent=0 // loop_pre_header
    _
  $region3: #{_trunk.4} parent=0 // loop_header
    %s9 = sphi 0, %s13
    %p10 = scmp.ge.s32.totalorder %s9, 4
    %s19 = sphi 0, %s21
    %s22 = sphi 0, %s19
    %s23 = sphi 0, %s22
    %s39 = sphi 0, %s23
    %s43 = sphi 0, %s43
    %s45 = sphi 0, %s43
    %s46 = sphi 0, %s45
    %s60 = sphi 0, %s46
    %s64 = sphi 0, %s64
    %s66 = sphi 0, %s64
    %s67 = sphi 0, %s66
    %s81 = sphi 0, %s67
    %s87 = sphi 0, %s89
    %s90 = sphi 0, %s87
    %s91 = sphi 0, %s90
    %s107 = sphi 0, %s91
  $region4: #{_trunk.4} parent=0 // loop_header_branch
    %12 = sbr.rel (%p10) target = $region8
  $region5: #{_trunk.4} parent=0 // loop_body
    %s14 = ssub.s32 %s9, 1
    %s15 = ssub.s32 %s9, 2
    %s16 = sadd.s32 %s9, 1
    %s17 = ssub.s32 %s9, %s16
    %p18 = scmp.eq.s32.totalorder %s17, 0
    %s20 = sadd.s32 %s19, 1
    %s21 = scalar_select %p18, %s19, %s20
    %p24 = pneg %p18
    %p25 = scmp.eq.s32.totalorder %s9, 1
    %p26 = por %p24, %p25
    %p27 = scmp.ne.s32.totalorder %s19, %s22
    %p28 = scmp.eq.s32.totalorder %s9, 0
    %p29 = por %p27, %p28
    %p30 = scmp.ne.s32.totalorder %s19, %s22
    %p31 = scmp.eq.s32.totalorder %s14, 1
    %p32 = por %p30, %p31
    %p33 = scmp.ne.s32.totalorder %s22, %s23
    %p34 = scmp.eq.s32.totalorder %s14, 0
    %p35 = por %p33, %p34
    %p36 = scmp.ne.s32.totalorder %s22, %s23
    %p37 = scmp.eq.s32.totalorder %s15, 1
    %p38 = por %p36, %p37
    %p40 = scmp.ne.s32.totalorder %s23, %s39
    %p41 = scmp.eq.s32.totalorder %s15, 0
    %p42 = por %p40, %p41
    %s44 = sadd.s32 %s43, 1
    %p47 = scmp.eq.s32.totalorder %s9, 1
    %p48 = scmp.ne.s32.totalorder %s43, %s45
    %p49 = scmp.eq.s32.totalorder %s9, 0
    %p50 = por %p48, %p49
    %p51 = scmp.ne.s32.totalorder %s43, %s45
    %p52 = scmp.eq.s32.totalorder %s14, 1
    %p53 = por %p51, %p52
    %p54 = scmp.ne.s32.totalorder %s45, %s46
    %p55 = scmp.eq.s32.totalorder %s14, 0
    %p56 = por %p54, %p55
    %p57 = scmp.ne.s32.totalorder %s45, %s46
    %p58 = scmp.eq.s32.totalorder %s15, 1
    %p59 = por %p57, %p58
    %p61 = scmp.ne.s32.totalorder %s46, %s60
    %p62 = scmp.eq.s32.totalorder %s15, 0
    %p63 = por %p61, %p62
    %s65 = sadd.s32 %s64, 1
    %p68 = scmp.eq.s32.totalorder %s9, 1
    %p69 = scmp.ne.s32.totalorder %s64, %s66
    %p70 = scmp.eq.s32.totalorder %s9, 0
    %p71 = por %p69, %p70
    %p72 = scmp.ne.s32.totalorder %s64, %s66
    %p73 = scmp.eq.s32.totalorder %s14, 1
    %p74 = por %p72, %p73
    %p75 = scmp.ne.s32.totalorder %s66, %s67
    %p76 = scmp.eq.s32.totalorder %s14, 0
    %p77 = por %p75, %p76
    %p78 = scmp.ne.s32.totalorder %s66, %s67
    %p79 = scmp.eq.s32.totalorder %s15, 1
    %p80 = por %p78, %p79
    %p82 = scmp.ne.s32.totalorder %s67, %s81
    %p83 = scmp.eq.s32.totalorder %s15, 0
    %p84 = por %p82, %p83
    %s85 = ssub.s32 %s9, %s16
    %p86 = scmp.eq.s32.totalorder %s85, 0
    %s88 = sadd.s32 %s87, 1
    %s89 = scalar_select %p86, %s87, %s88
    %p92 = pneg %p86
    %p93 = scmp.eq.s32.totalorder %s9, 1
    %p94 = por %p92, %p93
    %p95 = scmp.ne.s32.totalorder %s87, %s90
    %p96 = scmp.eq.s32.totalorder %s9, 0
    %p97 = por %p95, %p96
    %p98 = scmp.ne.s32.totalorder %s87, %s90
    %p99 = scmp.eq.s32.totalorder %s14, 1
    %p100 = por %p98, %p99
    %p101 = scmp.ne.s32.totalorder %s90, %s91
    %p102 = scmp.eq.s32.totalorder %s14, 0
    %p103 = por %p101, %p102
    %p104 = scmp.ne.s32.totalorder %s90, %s91
    %p105 = scmp.eq.s32.totalorder %s15, 1
    %p106 = por %p104, %p105
    %p108 = scmp.ne.s32.totalorder %s91, %s107
    %p109 = scmp.eq.s32.totalorder %s15, 0
    %p110 = por %p108, %p109
    %p111 = scmp.le.s32.totalorder 1, %s9
    %p112 = scmp.lt.s32.totalorder %s9, 3
    %p113 = pnand %p111, %p112
    %p114 = pneg %p113
    // Predicated region
    $region9: #{_trunk.4} parent=5 // pred_check
      _
    $region10: #{_trunk.4} parent=5 // pred_check_branch
      %116 = sbr.rel (%p113) target = $region12
    $region11: #{_trunk.4} parent=5 // pred_region
      %s117 = ssub.s32 %s9, 1
      // Predicated region
      $region13: #{_trunk.4} parent=11 // pred_check
        %p118 = pneg %p56
      $region14: #{_trunk.4} parent=11 // pred_check_branch
        %120 = sbr.rel (%p118) target = $region16
      $region15: #{_trunk.4} parent=11 // pred_region
        _
      $region16: #{_trunk.4} parent=11 // pred_fallthru
        _
      // Predicated region
      $region17: #{_trunk.4} parent=11 // pred_check
        %p121 = pneg %p77
      $region18: #{_trunk.4} parent=11 // pred_check_branch
        %123 = sbr.rel (%p121) target = $region20
      $region19: #{_trunk.4} parent=11 // pred_region
        _
      $region20: #{_trunk.4} parent=11 // pred_fallthru
        _
    $region12: #{_trunk.4} parent=5 // pred_fallthru
      _
    %p124 = scmp.lt.s32.totalorder %s9, 2
    // Predicated region
    $region21: #{_trunk.4} parent=5 // pred_check
      %p125 = pneg %p124
    $region22: #{_trunk.4} parent=5 // pred_check_branch
      %127 = sbr.rel (%p125) target = $region24
    $region23: #{_trunk.4} parent=5 // pred_region
      // Predicated region
      $region25: #{_trunk.4} parent=23 // pred_check
        %p128 = pneg %p29
      $region26: #{_trunk.4} parent=23 // pred_check_branch
        %130 = sbr.rel (%p128) target = $region28
      $region27: #{_trunk.4} parent=23 // pred_region
        %s131 = smul.u32 8, %s9
        %p132 = scmp.lt.s32.totalorder %s131, 15
        %s133 = scalar_select %p132, %s131, 15
        %s134 = smul.addr %s133, 4
        %s135 = scalar_lea.vmem %s0, %s134
        %s136 = smul.u32 8, %s9
      $region28: #{_trunk.4} parent=23 // pred_fallthru
        _
    $region24: #{_trunk.4} parent=5 // pred_fallthru
      _
    %p137 = scmp.le.s32.totalorder 1, %s9
    %p138 = scmp.lt.s32.totalorder %s9, 3
    %p139 = pnand %p137, %p138
    %p140 = pneg %p139
    // Predicated region
    $region29: #{_trunk.4} parent=5 // pred_check
      _
    $region30: #{_trunk.4} parent=5 // pred_check_branch
      %142 = sbr.rel (%p139) target = $region32
    $region31: #{_trunk.4} parent=5 // pred_region
      %s143 = ssub.s32 %s9, 1
      %s144 = smul.u32 8, %s14
      %p145 = scmp.lt.s32.totalorder %s144, 15
      %s146 = scalar_select %p145, %s144, 15
      %s147 = smul.addr %s146, 4
      %s148 = scalar_lea.vmem %s0, %s147
      %p149 = pneg %p35
      %p150 = pneg %p32
      %p151 = pneg %p56
      %p152 = pneg %p53
      %p153 = pneg %p77
      %p154 = pneg %p74
      %p155 = pneg %p103
      %p156 = pneg %p100
      %s157 = smul.u32 8, %s14
      %p158 = scmp.lt.s32.totalorder %s157, 15
      %s159 = scalar_select %p158, %s157, 15
      %s160 = smul.addr %s159, 4
      %s161 = scalar_lea.vmem %s3, %s160
      %s162 = smul.u32 8, %s14
      %p163 = scmp.lt.s32.totalorder %s162, 15
      %s164 = scalar_select %p163, %s162, 15
      %s165 = smul.addr %s164, 4
      %s166 = scalar_lea.vmem %s0, %s165
      %s167 = smul.u32 8, %s14
      %s168 = smul.u32 8, %s14
      %p169 = scmp.lt.s32.totalorder %s168, 15
      %s170 = scalar_select %p169, %s168, 15
      %s171 = smul.addr %s170, 4
      %s172 = scalar_lea.vmem %s3, %s171
      %s173 = smul.u32 8, %s14
      %v175 = vld [vmem:[%s166] sm:$0xf]
      %v176 = vld [vmem:[%s166 + $0x4] sm:$0xf]
      %v177 = vld [vmem:[%s166 + $0x8] sm:$0xf]
      %v178 = vld [vmem:[%s166 + $0xc] sm:$0xf]
      %v179 = vld [vmem:[%s166 + $0x10] sm:$0xf]
      %v180 = vld [vmem:[%s166 + $0x14] sm:$0xf]
      %v181 = vld [vmem:[%s166 + $0x18] sm:$0xf]
      %v182 = vld [vmem:[%s166 + $0x1c] sm:$0xf]
      %v183 = vld [vmem:[%s1] sm:$0xf]
      %v184 = vld [vmem:[%s1 + $0x4] sm:$0xf]
      %v185 = vld [vmem:[%s1 + $0x8] sm:$0xf]
      %v186 = vld [vmem:[%s1 + $0xc] sm:$0xf]
      %v187 = vld [vmem:[%s1 + $0x10] sm:$0xf]
      %v188 = vld [vmem:[%s1 + $0x14] sm:$0xf]
      %v189 = vld [vmem:[%s1 + $0x18] sm:$0xf]
      %v190 = vld [vmem:[%s1 + $0x1c] sm:$0xf]
      %v191 = vld [vmem:[%s1 + $0x20] sm:$0xf]
      %v192 = vld [vmem:[%s2] sm:$0x1]
      %v194 = vlaneseq
      %v195 = vshrl.u32 %v194, 7
      %v196 = vsub.s32 0, %v195
      %v197 = vrot.slane %v192, %v196
      %v207 = vunpack.c.l.b16 %v175
      %v208 = vunpack.c.l.b16 %v176
      %v209 = vunpack.c.l.b16 %v177
      %v210 = vunpack.c.l.b16 %v178
      %v211 = vunpack.c.l.b16 %v179
      %v212 = vunpack.c.l.b16 %v180
      %v213 = vunpack.c.l.b16 %v181
      %v214 = vunpack.c.l.b16 %v182
      %v215 = vpack.c.b16 %v208, %v207
      %v216 = vpack.c.b16 %v210, %v209
      %v217 = vpack.c.b16 %v212, %v211
      %v218 = vpack.c.b16 %v214, %v213
      %v228 = vunpack.c.l.b16 %v183
      %v229 = vunpack.c.l.b16 %v184
      %v230 = vunpack.c.l.b16 %v185
      %v231 = vunpack.c.l.b16 %v186
      %v232 = vunpack.c.l.b16 %v187
      %v233 = vunpack.c.l.b16 %v188
      %v234 = vunpack.c.l.b16 %v189
      %v235 = vunpack.c.l.b16 %v190
      %v236 = vunpack.c.l.b16 %v191
      %v237 = vpack.c.b16 %v229, %v228
      %v238 = vpack.c.b16 %v231, %v230
      %v239 = vpack.c.b16 %v233, %v232
      %v240 = vpack.c.b16 %v235, %v234
      %v241 = vpack.c.b16 %v236, %v236
      %vm246 = vcmask 588800
      %v248 = vsel %vm246, %v215, 0
      %v251 = vsel %vm246, %v216, 0
      %v254 = vsel %vm246, %v217, 0
      %v257 = vsel %vm246, %v218, 0
      %vm259 = vcmask 1043456
      %v261 = vsel %vm259, %v241, 0
      %263 = vmatprep.subr.bf16.mxu0 0
      %264 = vmatpush1.bf16.msra.mxu0 %v237
      %265 = vmatprep.subr.bf16.mxu0 0
      %266 = vmatpush1.bf16.msra.mxu0 %v238
      %267 = vmatprep.subr.bf16.mxu0 0
      %268 = vmatpush1.bf16.msra.mxu0 %v239
      %269 = vmatprep.subr.bf16.mxu0 0
      %270 = vmatpush1.bf16.msra.mxu0 %v240
      %271 = vmatprep.subr.bf16.mxu0 0
      %272 = vmatpush1.bf16.msra.mxu0 %v261
      %273 = vmatprep.subr.bf16.mxu0 0
      %274 = vmatpush1.bf16.msra.mxu0 0
      %275 = vmatprep.subr.bf16.mxu0 0
      %276 = vmatpush1.bf16.msra.mxu0 0
      %277 = vmatprep.subr.bf16.mxu0 0
      %278 = vmatpush1.bf16.msra.mxu0 0
      %279 = vmatprep.subr.bf16.mxu0 0
      %280 = vmatpush1.bf16.msra.mxu0 0
      %281 = vmatprep.subr.bf16.mxu0 0
      %282 = vmatpush1.bf16.msra.mxu0 0
      %283 = vmatprep.subr.bf16.mxu0 0
      %284 = vmatpush1.bf16.msra.mxu0 0
      %285 = vmatprep.subr.bf16.mxu0 0
      %286 = vmatpush1.bf16.msra.mxu0 0
      %287 = vmatprep.subr.bf16.mxu0 0
      %288 = vmatpush1.bf16.msra.mxu0 0
      %289 = vmatprep.subr.bf16.mxu0 0
      %290 = vmatpush1.bf16.msra.mxu0 0
      %291 = vmatprep.subr.bf16.mxu0 0
      %292 = vmatpush1.bf16.msra.mxu0 0
      %293 = vmatprep.subr.bf16.mxu0 0
      %294 = vmatpush1.bf16.msra.mxu0 0
      %295 = vmatprep.mubr.bf16.mxu0 0
      %296 = vmatmul.mubr.bf16.gmra.mrb[0].mxu0 %v248
      %v297 = vpop.f32.mrb[0].mxu0
      %v298 = vadd.f32 %v197, %v297
      %v299 = vpop.f32.mrb[0].mxu0
      %v300 = vpop.f32.mrb[0].mxu0
      %v301 = vadd.f32 %v197, %v300
      %v302 = vpop.f32.mrb[0].mxu0
      %303 = vmatprep.mubr.bf16.mxu0 0
      %304 = vmatmul.mubr.bf16.gmra.mrb[0].mxu0 %v251
      %v305 = vpop.f32.mrb[0].mxu0
      %v306 = vadd.f32 %v197, %v305
      %v307 = vpop.f32.mrb[0].mxu0
      %v308 = vpop.f32.mrb[0].mxu0
      %v309 = vadd.f32 %v197, %v308
      %v310 = vpop.f32.mrb[0].mxu0
      %311 = vmatprep.mubr.bf16.mxu0 0
      %312 = vmatmul.mubr.bf16.gmra.mrb[0].mxu0 %v254
      %v313 = vpop.f32.mrb[0].mxu0
      %v314 = vadd.f32 %v197, %v313
      %v315 = vpop.f32.mrb[0].mxu0
      %v316 = vpop.f32.mrb[0].mxu0
      %v317 = vadd.f32 %v197, %v316
      %v318 = vpop.f32.mrb[0].mxu0
      %319 = vmatprep.mubr.bf16.mxu0 0
      %320 = vmatmul.mubr.bf16.gmra.mrb[0].mxu0 %v257
      %v321 = vpop.f32.mrb[0].mxu0
      %v322 = vadd.f32 %v197, %v321
      %v323 = vpop.f32.mrb[0].mxu0
      %v324 = vpop.f32.mrb[0].mxu0
      %v325 = vadd.f32 %v197, %v324
      %v326 = vpop.f32.mrb[0].mxu0
      %327 = vdwg.mxu0
      %v328 = vmax.f32 %v298, 0.0
      %v329 = vmax.f32 %v301, 0.0
      %v330 = vmax.f32 %v306, 0.0
      %v331 = vmax.f32 %v309, 0.0
      %v332 = vmax.f32 %v314, 0.0
      %v333 = vmax.f32 %v317, 0.0
      %v334 = vmax.f32 %v322, 0.0
      %v335 = vmax.f32 %v325, 0.0
      %v336 = vpack.c.bf16 %v329, %v328
      %v337 = vpack.c.bf16 %v331, %v330
      %v338 = vpack.c.bf16 %v333, %v332
      %v339 = vpack.c.bf16 %v335, %v334
      %v344 = vunpack.c.l.b16 %v336
      %v345 = vunpack.c.h.b16 %v336
      %v346 = vunpack.c.l.b16 %v337
      %v347 = vunpack.c.h.b16 %v337
      %v348 = vunpack.c.l.b16 %v338
      %v349 = vunpack.c.h.b16 %v338
      %v350 = vunpack.c.l.b16 %v339
      %v351 = vunpack.c.h.b16 %v339
      %v352 = vpack.c.b16 %v344, %v344
      %v353 = vpack.c.b16 %v345, %v345
      %v354 = vpack.c.b16 %v346, %v346
      %v355 = vpack.c.b16 %v347, %v347
      %v356 = vpack.c.b16 %v348, %v348
      %v357 = vpack.c.b16 %v349, %v349
      %v358 = vpack.c.b16 %v350, %v350
      %v359 = vpack.c.b16 %v351, %v351
      %vm368 = vcmask 125952
      %369 = vst.msk [vmem:[%s172] sm:$0xf] %vm368, %v352
      %370 = vst.msk [vmem:[%s172 + $0x4] sm:$0xf] %vm368, %v353
      %371 = vst.msk [vmem:[%s172 + $0x8] sm:$0xf] %vm368, %v354
      %372 = vst.msk [vmem:[%s172 + $0xc] sm:$0xf] %vm368, %v355
      %373 = vst.msk [vmem:[%s172 + $0x10] sm:$0xf] %vm368, %v356
      %374 = vst.msk [vmem:[%s172 + $0x14] sm:$0xf] %vm368, %v357
      %375 = vst.msk [vmem:[%s172 + $0x18] sm:$0xf] %vm368, %v358
      %376 = vst.msk [vmem:[%s172 + $0x1c] sm:$0xf] %vm368, %v359
      %s377 = smul.u32 8, %s14
      %p378 = scmp.lt.s32.totalorder %s377, 15
      %s379 = scalar_select %p378, %s377, 15
      %s380 = smul.addr %s379, 4
      %s381 = scalar_lea.vmem %s3, %s380
      // Predicated region
      $region33: #{_trunk.4} parent=31 // pred_check
        %p382 = pneg %p100
      $region34: #{_trunk.4} parent=31 // pred_check_branch
        %384 = sbr.rel (%p382) target = $region36
      $region35: #{_trunk.4} parent=31 // pred_region
        %s385 = smul.u32 8, %s14
      $region36: #{_trunk.4} parent=31 // pred_fallthru
        _
    $region32: #{_trunk.4} parent=5 // pred_fallthru
      _
    %p386 = scmp.le.s32.totalorder 2, %s9
    // Predicated region
    $region37: #{_trunk.4} parent=5 // pred_check
      %p387 = pneg %p386
    $region38: #{_trunk.4} parent=5 // pred_check_branch
      %389 = sbr.rel (%p387) target = $region40
    $region39: #{_trunk.4} parent=5 // pred_region
      %s390 = ssub.s32 %s9, 2
      // Predicated region
      $region41: #{_trunk.4} parent=39 // pred_check
        %p391 = pneg %p106
      $region42: #{_trunk.4} parent=39 // pred_check_branch
        %393 = sbr.rel (%p391) target = $region44
      $region43: #{_trunk.4} parent=39 // pred_region
        %s394 = smul.u32 8, %s15
        %p395 = scmp.lt.s32.totalorder %s394, 15
        %s396 = scalar_select %p395, %s394, 15
        %s397 = smul.addr %s396, 4
        %s398 = scalar_lea.vmem %s3, %s397
      $region44: #{_trunk.4} parent=39 // pred_fallthru
        _
    $region40: #{_trunk.4} parent=5 // pred_fallthru
      _
  $region6: #{_trunk.4} parent=0 // loop_footer
    %s13 = sadd.s32 1, %s9
  $region7: #{_trunk.4} parent=0 // loop_footer_branch
    %8 = sbr.rel target = $region3
  $region8: #{_trunk.4} parent=0 // loop_exit
    _

// kernel: _trunk.5
$region0: #{_trunk.5}
  #allocation0 [shape = 'u32[]', space=smem, size = 0x4, offset = 0x4, fixed_abs, tag = 'smem constant byte address 0x4 - core index']
  #allocation1 [shape = 'u32[144,128]{1,0:T(1,128)}', space=vmem, size = 0x12000, scoped, tag = 'internal scratch']
  %s0 = inlined_call_operand.vmem [shape: bf16[2,64,16], index: 0, kind: input, shape index: {}]
  %s1 = inlined_call_operand.vmem [shape: f32[64,1], index: 1, kind: input, shape index: {}]
  %s2 = inlined_call_operand.vmem [shape: f32[64,1], index: 2, kind: input, shape index: {}]
  %s3 = inlined_call_operand.vmem [shape: f32[2,2,16], index: 3, kind: output, shape index: {}]
  %s4 = sld [smem:[#allocation0]]
  $region45: #{_trunk.5} parent=0
    _
  %s6 = ssub.s32 1, %s4
  %s7 = scalar_select 0, %s6, %s4
  loop: start=0, step=1, limit=4
  $region2: #{_trunk.5} parent=0 // loop_pre_header
    _
  $region3: #{_trunk.5} parent=0 // loop_header
    %s9 = sphi 0, %s13
    %p10 = scmp.ge.s32.totalorder %s9, 4
    %s19 = sphi 0, %s21
    %s22 = sphi 0, %s19
    %s23 = sphi 0, %s22
    %s39 = sphi 0, %s23
    %s43 = sphi 0, %s43
    %s45 = sphi 0, %s43
    %s46 = sphi 0, %s45
    %s60 = sphi 0, %s46
    %s64 = sphi 0, %s64
    %s66 = sphi 0, %s64
    %s67 = sphi 0, %s66
    %s81 = sphi 0, %s67
    %s87 = sphi 0, %s89
    %s90 = sphi 0, %s87
    %s91 = sphi 0, %s90
    %s107 = sphi 0, %s91
  $region4: #{_trunk.5} parent=0 // loop_header_branch
    %12 = sbr.rel (%p10) target = $region8
  $region5: #{_trunk.5} parent=0 // loop_body
    %s14 = ssub.s32 %s9, 1
    %s15 = ssub.s32 %s9, 2
    %s16 = sadd.s32 %s9, 1
    %s17 = ssub.s32 %s9, %s16
    %p18 = scmp.eq.s32.totalorder %s17, 0
    %s20 = sadd.s32 %s19, 1
    %s21 = scalar_select %p18, %s19, %s20
    %p24 = pneg %p18
    %p25 = scmp.eq.s32.totalorder %s9, 1
    %p26 = por %p24, %p25
    %p27 = scmp.ne.s32.totalorder %s19, %s22
    %p28 = scmp.eq.s32.totalorder %s9, 0
    %p29 = por %p27, %p28
    %p30 = scmp.ne.s32.totalorder %s19, %s22
    %p31 = scmp.eq.s32.totalorder %s14, 1
    %p32 = por %p30, %p31
    %p33 = scmp.ne.s32.totalorder %s22, %s23
    %p34 = scmp.eq.s32.totalorder %s14, 0
    %p35 = por %p33, %p34
    %p36 = scmp.ne.s32.totalorder %s22, %s23
    %p37 = scmp.eq.s32.totalorder %s15, 1
    %p38 = por %p36, %p37
    %p40 = scmp.ne.s32.totalorder %s23, %s39
    %p41 = scmp.eq.s32.totalorder %s15, 0
    %p42 = por %p40, %p41
    %s44 = sadd.s32 %s43, 1
    %p47 = scmp.eq.s32.totalorder %s9, 1
    %p48 = scmp.ne.s32.totalorder %s43, %s45
    %p49 = scmp.eq.s32.totalorder %s9, 0
    %p50 = por %p48, %p49
    %p51 = scmp.ne.s32.totalorder %s43, %s45
    %p52 = scmp.eq.s32.totalorder %s14, 1
    %p53 = por %p51, %p52
    %p54 = scmp.ne.s32.totalorder %s45, %s46
    %p55 = scmp.eq.s32.totalorder %s14, 0
    %p56 = por %p54, %p55
    %p57 = scmp.ne.s32.totalorder %s45, %s46
    %p58 = scmp.eq.s32.totalorder %s15, 1
    %p59 = por %p57, %p58
    %p61 = scmp.ne.s32.totalorder %s46, %s60
    %p62 = scmp.eq.s32.totalorder %s15, 0
    %p63 = por %p61, %p62
    %s65 = sadd.s32 %s64, 1
    %p68 = scmp.eq.s32.totalorder %s9, 1
    %p69 = scmp.ne.s32.totalorder %s64, %s66
    %p70 = scmp.eq.s32.totalorder %s9, 0
    %p71 = por %p69, %p70
    %p72 = scmp.ne.s32.totalorder %s64, %s66
    %p73 = scmp.eq.s32.totalorder %s14, 1
    %p74 = por %p72, %p73
    %p75 = scmp.ne.s32.totalorder %s66, %s67
    %p76 = scmp.eq.s32.totalorder %s14, 0
    %p77 = por %p75, %p76
    %p78 = scmp.ne.s32.totalorder %s66, %s67
    %p79 = scmp.eq.s32.totalorder %s15, 1
    %p80 = por %p78, %p79
    %p82 = scmp.ne.s32.totalorder %s67, %s81
    %p83 = scmp.eq.s32.totalorder %s15, 0
    %p84 = por %p82, %p83
    %s85 = ssub.s32 %s9, %s16
    %p86 = scmp.eq.s32.totalorder %s85, 0
    %s88 = sadd.s32 %s87, 1
    %s89 = scalar_select %p86, %s87, %s88
    %p92 = pneg %p86
    %p93 = scmp.eq.s32.totalorder %s9, 1
    %p94 = por %p92, %p93
    %p95 = scmp.ne.s32.totalorder %s87, %s90
    %p96 = scmp.eq.s32.totalorder %s9, 0
    %p97 = por %p95, %p96
    %p98 = scmp.ne.s32.totalorder %s87, %s90
    %p99 = scmp.eq.s32.totalorder %s14, 1
    %p100 = por %p98, %p99
    %p101 = scmp.ne.s32.totalorder %s90, %s91
    %p102 = scmp.eq.s32.totalorder %s14, 0
    %p103 = por %p101, %p102
    %p104 = scmp.ne.s32.totalorder %s90, %s91
    %p105 = scmp.eq.s32.totalorder %s15, 1
    %p106 = por %p104, %p105
    %p108 = scmp.ne.s32.totalorder %s91, %s107
    %p109 = scmp.eq.s32.totalorder %s15, 0
    %p110 = por %p108, %p109
    %p111 = scmp.le.s32.totalorder 1, %s9
    %p112 = scmp.lt.s32.totalorder %s9, 3
    %p113 = pnand %p111, %p112
    %p114 = pneg %p113
    // Predicated region
    $region9: #{_trunk.5} parent=5 // pred_check
      _
    $region10: #{_trunk.5} parent=5 // pred_check_branch
      %116 = sbr.rel (%p113) target = $region12
    $region11: #{_trunk.5} parent=5 // pred_region
      %s117 = ssub.s32 %s9, 1
      // Predicated region
      $region13: #{_trunk.5} parent=11 // pred_check
        %p118 = pneg %p56
      $region14: #{_trunk.5} parent=11 // pred_check_branch
        %120 = sbr.rel (%p118) target = $region16
      $region15: #{_trunk.5} parent=11 // pred_region
        _
      $region16: #{_trunk.5} parent=11 // pred_fallthru
        _
      // Predicated region
      $region17: #{_trunk.5} parent=11 // pred_check
        %p121 = pneg %p77
      $region18: #{_trunk.5} parent=11 // pred_check_branch
        %123 = sbr.rel (%p121) target = $region20
      $region19: #{_trunk.5} parent=11 // pred_region
        _
      $region20: #{_trunk.5} parent=11 // pred_fallthru
        _
    $region12: #{_trunk.5} parent=5 // pred_fallthru
      _
    %p124 = scmp.lt.s32.totalorder %s9, 2
    // Predicated region
    $region21: #{_trunk.5} parent=5 // pred_check
      %p125 = pneg %p124
    $region22: #{_trunk.5} parent=5 // pred_check_branch
      %127 = sbr.rel (%p125) target = $region24
    $region23: #{_trunk.5} parent=5 // pred_region
      // Predicated region
      $region25: #{_trunk.5} parent=23 // pred_check
        %p128 = pneg %p29
      $region26: #{_trunk.5} parent=23 // pred_check_branch
        %130 = sbr.rel (%p128) target = $region28
      $region27: #{_trunk.5} parent=23 // pred_region
        %p131 = scmp.lt.s32.totalorder %s9, 1
        %s132 = scalar_select %p131, %s9, 1
        %s133 = smul.addr %s132, 8
        %s134 = smul.addr %s133, 4
        %s135 = scalar_lea.vmem %s0, %s134
      $region28: #{_trunk.5} parent=23 // pred_fallthru
        _
    $region24: #{_trunk.5} parent=5 // pred_fallthru
      _
    %p136 = scmp.le.s32.totalorder 1, %s9
    %p137 = scmp.lt.s32.totalorder %s9, 3
    %p138 = pnand %p136, %p137
    %p139 = pneg %p138
    // Predicated region
    $region29: #{_trunk.5} parent=5 // pred_check
      _
    $region30: #{_trunk.5} parent=5 // pred_check_branch
      %141 = sbr.rel (%p138) target = $region32
    $region31: #{_trunk.5} parent=5 // pred_region
      %s142 = ssub.s32 %s9, 1
      %p143 = scmp.lt.s32.totalorder %s14, 1
      %s144 = scalar_select %p143, %s14, 1
      %s145 = smul.addr %s144, 8
      %s146 = smul.addr %s145, 4
      %s147 = scalar_lea.vmem %s0, %s146
      %p148 = pneg %p35
      %p149 = pneg %p32
      %p150 = pneg %p56
      %p151 = pneg %p53
      %p152 = pneg %p77
      %p153 = pneg %p74
      %p154 = pneg %p103
      %p155 = pneg %p100
      %p156 = scmp.lt.s32.totalorder %s14, 1
      %s157 = scalar_select %p156, %s14, 1
      %s158 = smul.addr %s157, 2
      %s159 = scalar_lea.vmem %s3, %s158
      %p160 = scmp.lt.s32.totalorder %s14, 1
      %s161 = scalar_select %p160, %s14, 1
      %s162 = smul.addr %s161, 8
      %s163 = smul.addr %s162, 4
      %s164 = scalar_lea.vmem %s0, %s163
      %p165 = scmp.lt.s32.totalorder %s14, 1
      %s166 = scalar_select %p165, %s14, 1
      %s167 = smul.addr %s166, 2
      %s168 = scalar_lea.vmem %s3, %s167
      %v169 = vld [vmem:[%s164] sm:$0xf]
      %v170 = vld [vmem:[%s164 + $0x4] sm:$0xf]
      %v171 = vld [vmem:[%s164 + $0x8] sm:$0xf]
      %v172 = vld [vmem:[%s164 + $0xc] sm:$0xf]
      %v173 = vld [vmem:[%s164 + $0x10] sm:$0xf]
      %v174 = vld [vmem:[%s164 + $0x14] sm:$0xf]
      %v175 = vld [vmem:[%s164 + $0x18] sm:$0xf]
      %v176 = vld [vmem:[%s164 + $0x1c] sm:$0xf]
      %v177 = vunpack.c.l.bf16 %v169
      %v178 = vunpack.c.l.bf16 %v170
      %v179 = vunpack.c.l.bf16 %v171
      %v180 = vunpack.c.l.bf16 %v172
      %v181 = vunpack.c.l.bf16 %v173
      %v182 = vunpack.c.l.bf16 %v174
      %v183 = vunpack.c.l.bf16 %v175
      %v184 = vunpack.c.l.bf16 %v176
      %vm185 = vcmask 130048
      %v186 = vsel %vm185, %v177, -inf
      %v187 = vsel %vm185, %v178, -inf
      %v188 = vsel %vm185, %v179, -inf
      %v189 = vsel %vm185, %v180, -inf
      %v190 = vsel %vm185, %v181, -inf
      %v191 = vmax.f32 %v186, %v190
      %v192 = vsel %vm185, %v182, -inf
      %v193 = vmax.f32 %v187, %v192
      %v194 = vsel %vm185, %v183, -inf
      %v195 = vmax.f32 %v188, %v194
      %v196 = vsel %vm185, %v184, -inf
      %v197 = vmax.f32 %v189, %v196
      %v198 = vmax.f32 %v191, %v193
      %v199 = vmax.f32 %v195, %v197
      %v200 = vmax.f32 %v198, %v199
      %v201 = vrot.slane %v200, 4
      %v202 = vmax.f32 %v200, %v201
      %v203 = vrot.slane %v202, 2
      %v204 = vmax.f32 %v202, %v203
      %v205 = vrot.slane %v204, 1
      %v206 = vmax.f32 %v204, %v205
      %v207 = vsub.f32 %v177, %v206
      %v208 = vsub.f32 %v178, %v206
      %v209 = vsub.f32 %v179, %v206
      %v210 = vsub.f32 %v180, %v206
      %v211 = vsub.f32 %v181, %v206
      %v212 = vsub.f32 %v182, %v206
      %v213 = vsub.f32 %v183, %v206
      %v214 = vsub.f32 %v184, %v206
      %v215 = vmul.f32 %v207, 1.442695
      %v216 = vpow.pop %v215
      %v217 = vmul.f32 %v208, 1.442695
      %v218 = vpow.pop %v217
      %v219 = vmul.f32 %v209, 1.442695
      %v220 = vpow.pop %v219
      %v221 = vmul.f32 %v210, 1.442695
      %v222 = vpow.pop %v221
      %v223 = vmul.f32 %v211, 1.442695
      %v224 = vpow.pop %v223
      %v225 = vmul.f32 %v212, 1.442695
      %v226 = vpow.pop %v225
      %v227 = vmul.f32 %v213, 1.442695
      %v228 = vpow.pop %v227
      %v229 = vmul.f32 %v214, 1.442695
      %v230 = vpow.pop %v229
      %v231 = vsel %vm185, %v216, 0.0
      %v232 = vsel %vm185, %v218, 0.0
      %v233 = vadd.f32 %v231, %v232
      %v234 = vsel %vm185, %v220, 0.0
      %v235 = vadd.f32 %v233, %v234
      %v236 = vsel %vm185, %v222, 0.0
      %v237 = vadd.f32 %v235, %v236
      %v238 = vsel %vm185, %v224, 0.0
      %v239 = vadd.f32 %v237, %v238
      %v240 = vsel %vm185, %v226, 0.0
      %v241 = vadd.f32 %v239, %v240
      %v242 = vsel %vm185, %v228, 0.0
      %v243 = vadd.f32 %v241, %v242
      %v244 = vsel %vm185, %v230, 0.0
      %v245 = vadd.f32 %v243, %v244
      %v246 = vrot.slane %v245, 4
      %v247 = vadd.f32 %v245, %v246
      %v248 = vrot.slane %v247, 2
      %v249 = vadd.f32 %v247, %v248
      %v250 = vrot.slane %v249, 1
      %v251 = vadd.f32 %v249, %v250
      %v252 = vrcp.pop %v251
      %v253 = vld [vmem:[%s1] sm:$0xff]
      %v254 = vld [vmem:[%s1 + $0x8] sm:$0xff]
      %v255 = vld [vmem:[%s1 + $0x10] sm:$0xff]
      %v256 = vld [vmem:[%s1 + $0x18] sm:$0xff]
      %v257 = vld [vmem:[%s1 + $0x20] sm:$0xff]
      %v258 = vld [vmem:[%s1 + $0x28] sm:$0xff]
      %v259 = vld [vmem:[%s1 + $0x30] sm:$0xff]
      %v260 = vld [vmem:[%s1 + $0x38] sm:$0xff]
      %262 = vset.pattern.permute.xlu0 0
      %263 = vperm.xlu0 %262, %v253
      %v264 = vpop.permute.xlu0 %263
      %267 = vset.pattern.permute.xlu0 0
      %268 = vperm.xlu0 %267, %v254
      %v269 = vpop.permute.xlu0 %268
      %272 = vset.pattern.permute.xlu0 0
      %273 = vperm.xlu0 %272, %v255
      %v274 = vpop.permute.xlu0 %273
      %277 = vset.pattern.permute.xlu0 0
      %278 = vperm.xlu0 %277, %v256
      %v279 = vpop.permute.xlu0 %278
      %282 = vset.pattern.permute.xlu0 0
      %283 = vperm.xlu0 %282, %v257
      %v284 = vpop.permute.xlu0 %283
      %287 = vset.pattern.permute.xlu0 0
      %288 = vperm.xlu0 %287, %v258
      %v289 = vpop.permute.xlu0 %288
      %292 = vset.pattern.permute.xlu0 0
      %293 = vperm.xlu0 %292, %v259
      %v294 = vpop.permute.xlu0 %293
      %297 = vset.pattern.permute.xlu0 0
      %298 = vperm.xlu0 %297, %v260
      %v299 = vpop.permute.xlu0 %298
      %v301 = vmul.f32 %v216, %v264
      %v302 = vmul.f32 %v218, %v269
      %v303 = vmul.f32 %v220, %v274
      %v304 = vmul.f32 %v222, %v279
      %v305 = vmul.f32 %v224, %v284
      %v306 = vmul.f32 %v226, %v289
      %v307 = vmul.f32 %v228, %v294
      %v308 = vmul.f32 %v230, %v299
      %v309 = vsel %vm185, %v301, 0.0
      %v310 = vsel %vm185, %v302, 0.0
      %v311 = vadd.f32 %v309, %v310
      %v312 = vsel %vm185, %v303, 0.0
      %v313 = vadd.f32 %v311, %v312
      %v314 = vsel %vm185, %v304, 0.0
      %v315 = vadd.f32 %v313, %v314
      %v316 = vsel %vm185, %v305, 0.0
      %v317 = vadd.f32 %v315, %v316
      %v318 = vsel %vm185, %v306, 0.0
      %v319 = vadd.f32 %v317, %v318
      %v320 = vsel %vm185, %v307, 0.0
      %v321 = vadd.f32 %v319, %v320
      %v322 = vsel %vm185, %v308, 0.0
      %v323 = vadd.f32 %v321, %v322
      %v324 = vrot.slane %v323, 4
      %v325 = vadd.f32 %v323, %v324
      %v326 = vrot.slane %v325, 2
      %v327 = vadd.f32 %v325, %v326
      %v328 = vrot.slane %v327, 1
      %v329 = vadd.f32 %v327, %v328
      %v330 = vmul.f32 %v329, %v252
      %v331 = vld [vmem:[%s2] sm:$0xff]
      %v332 = vld [vmem:[%s2 + $0x8] sm:$0xff]
      %v333 = vld [vmem:[%s2 + $0x10] sm:$0xff]
      %v334 = vld [vmem:[%s2 + $0x18] sm:$0xff]
      %v335 = vld [vmem:[%s2 + $0x20] sm:$0xff]
      %v336 = vld [vmem:[%s2 + $0x28] sm:$0xff]
      %v337 = vld [vmem:[%s2 + $0x30] sm:$0xff]
      %v338 = vld [vmem:[%s2 + $0x38] sm:$0xff]
      %340 = vset.pattern.permute.xlu0 0
      %341 = vperm.xlu0 %340, %v331
      %v342 = vpop.permute.xlu0 %341
      %345 = vset.pattern.permute.xlu0 0
      %346 = vperm.xlu0 %345, %v332
      %v347 = vpop.permute.xlu0 %346
      %350 = vset.pattern.permute.xlu0 0
      %351 = vperm.xlu0 %350, %v333
      %v352 = vpop.permute.xlu0 %351
      %355 = vset.pattern.permute.xlu0 0
      %356 = vperm.xlu0 %355, %v334
      %v357 = vpop.permute.xlu0 %356
      %360 = vset.pattern.permute.xlu0 0
      %361 = vperm.xlu0 %360, %v335
      %v362 = vpop.permute.xlu0 %361
      %365 = vset.pattern.permute.xlu0 0
      %366 = vperm.xlu0 %365, %v336
      %v367 = vpop.permute.xlu0 %366
      %370 = vset.pattern.permute.xlu0 0
      %371 = vperm.xlu0 %370, %v337
      %v372 = vpop.permute.xlu0 %371
      %375 = vset.pattern.permute.xlu0 0
      %376 = vperm.xlu0 %375, %v338
      %v377 = vpop.permute.xlu0 %376
      %v379 = vmul.f32 %v216, %v342
      %v380 = vmul.f32 %v218, %v347
      %v381 = vmul.f32 %v220, %v352
      %v382 = vmul.f32 %v222, %v357
      %v383 = vmul.f32 %v224, %v362
      %v384 = vmul.f32 %v226, %v367
      %v385 = vmul.f32 %v228, %v372
      %v386 = vmul.f32 %v230, %v377
      %v387 = vsel %vm185, %v379, 0.0
      %v388 = vsel %vm185, %v380, 0.0
      %v389 = vadd.f32 %v387, %v388
      %v390 = vsel %vm185, %v381, 0.0
      %v391 = vadd.f32 %v389, %v390
      %v392 = vsel %vm185, %v382, 0.0
      %v393 = vadd.f32 %v391, %v392
      %v394 = vsel %vm185, %v383, 0.0
      %v395 = vadd.f32 %v393, %v394
      %v396 = vsel %vm185, %v384, 0.0
      %v397 = vadd.f32 %v395, %v396
      %v398 = vsel %vm185, %v385, 0.0
      %v399 = vadd.f32 %v397, %v398
      %v400 = vsel %vm185, %v386, 0.0
      %v401 = vadd.f32 %v399, %v400
      %v402 = vrot.slane %v401, 4
      %v403 = vadd.f32 %v401, %v402
      %v404 = vrot.slane %v403, 2
      %v405 = vadd.f32 %v403, %v404
      %v406 = vrot.slane %v405, 1
      %v407 = vadd.f32 %v405, %v406
      %v408 = vmul.f32 %v407, %v252
      %vm409 = vcmask 1040384
      %v410 = vsel %vm409, %v330, %v408
      %vm411 = vcmask 123904
      %412 = vst.msk [vmem:[%s168] sm:$0x3] %vm411, %v410
      %p413 = scmp.lt.s32.totalorder %s14, 1
      %s414 = scalar_select %p413, %s14, 1
      %s415 = smul.addr %s414, 2
      %s416 = scalar_lea.vmem %s3, %s415
      // Predicated region
      $region33: #{_trunk.5} parent=31 // pred_check
        %p417 = pneg %p100
      $region34: #{_trunk.5} parent=31 // pred_check_branch
        %419 = sbr.rel (%p417) target = $region36
      $region35: #{_trunk.5} parent=31 // pred_region
        _
      $region36: #{_trunk.5} parent=31 // pred_fallthru
        _
    $region32: #{_trunk.5} parent=5 // pred_fallthru
      _
    %p420 = scmp.le.s32.totalorder 2, %s9
    // Predicated region
    $region37: #{_trunk.5} parent=5 // pred_check
      %p421 = pneg %p420
    $region38: #{_trunk.5} parent=5 // pred_check_branch
      %423 = sbr.rel (%p421) target = $region40
    $region39: #{_trunk.5} parent=5 // pred_region
      %s424 = ssub.s32 %s9, 2
      // Predicated region
      $region41: #{_trunk.5} parent=39 // pred_check
        %p425 = pneg %p106
      $region42: #{_trunk.5} parent=39 // pred_check_branch
        %427 = sbr.rel (%p425) target = $region44
      $region43: #{_trunk.5} parent=39 // pred_region
        %p428 = scmp.lt.s32.totalorder %s15, 1
        %s429 = scalar_select %p428, %s15, 1
        %s430 = smul.addr %s429, 2
        %s431 = scalar_lea.vmem %s3, %s430
      $region44: #{_trunk.5} parent=39 // pred_fallthru
        _
    $region40: #{_trunk.5} parent=5 // pred_fallthru
      _
  $region6: #{_trunk.5} parent=0 // loop_footer
    %s13 = sadd.s32 1, %s9
  $region7: #{_trunk.5} parent=0 // loop_footer_branch
    %8 = sbr.rel target = $region3
  $region8: #{_trunk.5} parent=0 // loop_exit
    _

</llo_original>
